<compile_context>
chip_gen: v7x
topology: tpu7x:2x2x1
jax: 0.10.0
libtpu: 0.0.40
codegen_flags: <defaults>
</compile_context>

<pallas_src>
import functools

import jax
import jax.numpy as jnp
from jax.experimental import pallas as pl
from jax.experimental.pallas import tpu as pltpu


def _round_up(x, m):
    return -(-x // m) * m


def _budgets():
    """(per-step total VMEM byte budget, vmem_limit_bytes), generation-aware."""
    vmem = 64 * 1024 * 1024  # v7x-safe default (smallest VMEM per TensorCore)
    try:
        vmem = int(getattr(pltpu.get_tpu_info(), "vmem_capacity_bytes", vmem))
    except Exception:
        pass
    if vmem >= 128 * 1024 * 1024:                 # v5e / v6e: free headroom
        return 32 * 1024 * 1024, 64 * 1024 * 1024
    return 16 * 1024 * 1024, 32 * 1024 * 1024     # v7x: 64 MiB/TC, stay modest


def _per_row_bytes(n, itemsize):
    """Honest per-step VMEM bytes per (padded) row of a full-N block:
    lane-padded, double-buffered native-dtype input + ~3 full f32 temporaries
    (the .astype(f32) copy, the exp() result, headroom for the select/masks)."""
    lanes = _round_up(n, 128)
    return lanes * (2 * itemsize + 3 * 4)


def _choose_tiles(rows, n, itemsize, step_budget):
    """Pick (tile_rows, tile_n, sublane) under the honest per-step budget."""
    sub = max(8, 32 // itemsize)          # f32 -> 8, bf16/f16 -> 16, int8/fp8 -> 32
    prb_full = _per_row_bytes(n, itemsize)

    if sub * prb_full <= step_budget:
        # No spatial split: full H*W per block; grow + balance the row tiles.
        tile_n = n
        if rows <= sub:
            return rows, tile_n, sub      # full dim -> always legal
        cap = max(sub, (step_budget // prb_full) // sub * sub)
        n_tiles = max(2, -(-rows // cap))  # >= 2 row tiles keeps both v7x TCs busy
        if n_tiles % 2:
            n_tiles += 1                   # even tile count -> balanced megacore split
        tile_rows = min(cap, _round_up(-(-rows // n_tiles), sub))
        return max(sub, tile_rows), tile_n, sub

    # Huge H*W: split the spatial axis (online-LSE across blocks).
    tile_rows = rows if rows <= sub else sub
    rows_pad = _round_up(tile_rows, sub)
    tile_n = (step_budget // (rows_pad * (2 * itemsize + 3 * 4))) // 128 * 128
    tile_n = max(128, min(tile_n, _round_up(n, 128)))
    return tile_rows, tile_n, sub


def _lse_pool_kernel_single(x_ref, o_ref, *, r, eps, inv_n):
    """Fast path: the whole spatial axis is in one block (common pooling case)."""
    x = x_ref[...].astype(jnp.float32)            # per-tile upcast in VMEM
    m = jnp.max(x, axis=-1, keepdims=True)        # (T, 1)
    p = jnp.exp(r * (x - m))
    mean = jnp.sum(p, axis=-1, keepdims=True) * inv_n
    o_ref[...] = (m + (1.0 / r) * jnp.log(eps + mean)).astype(o_ref.dtype)


def _lse_pool_kernel_split(x_ref, o_ref, m_ref, s_ref, *, r, eps, n_total,
                           tile_n, mask_tail):
    """Online log-sum-exp over the spatial (last) axis, split across grid dim 1.

    x_ref: (tile_rows, tile_n) input block (native dtype)
    o_ref: (tile_rows, 1) output block (written on the last spatial step)
    m_ref, s_ref: (tile_rows, 1) f32 VMEM scratch (running max / rescaled sum)
    """
    k = pl.program_id(1)
    last = pl.num_programs(1) - 1

    @pl.when(k == 0)
    def _init():
        m_ref[...] = jnp.full(m_ref.shape, -jnp.inf, m_ref.dtype)
        s_ref[...] = jnp.zeros(s_ref.shape, s_ref.dtype)

    x = x_ref[...].astype(jnp.float32)

    if mask_tail:
        # Only the last spatial block has out-of-bounds columns.  Gate the
        # threshold on k so non-last steps compare against tile_n (all true):
        # the iota/compare run over a tiny (1, tile_n) strip and only one
        # full-tile select is paid per step.  r > 0 is asserted in the wrapper,
        # so -inf columns contribute exp(-inf) = 0 and never win the max.
        limit = jnp.where(k == last, n_total - k * tile_n, tile_n)
        col = jax.lax.broadcasted_iota(jnp.int32, (1, tile_n), 1)
        x = jnp.where(col < limit, x, -jnp.inf)

    blk_max = jnp.max(x, axis=-1, keepdims=True)   # (T, 1)
    m_prev = m_ref[...]
    m_new = jnp.maximum(m_prev, blk_max)
    alpha = jnp.exp(r * (m_prev - m_new))          # rescale old sum
    p = jnp.exp(r * (x - m_new))                   # (T, tile_n)
    s_ref[...] = alpha * s_ref[...] + jnp.sum(p, axis=-1, keepdims=True)
    m_ref[...] = m_new

    @pl.when(k == last)
    def _finalize():
        mean = s_ref[...] * (1.0 / n_total)
        o_ref[...] = (m_ref[...] + (1.0 / r) * jnp.log(eps + mean)).astype(o_ref.dtype)


def lse_pooling(x, r=10.0, eps=1e-6, *, step_budget=None):
    """LSE pooling over spatial dims. x: (B, C, H, W) -> (B, C) float32."""
    assert r > 0, "r must be positive (the -inf tail mask relies on exp(r*.) -> 0)"
    B, C, H, W = x.shape
    N = H * W
    rows = B * C

    # Native dtype, contiguous-dim reshape: no extra HBM pass (no upcast, no pad).
    xf = x.reshape(rows, N)
    itemsize = xf.dtype.itemsize

    auto_budget, vmem_limit = _budgets()
    budget = int(step_budget) if step_budget is not None else auto_budget

    tile_rows, tile_n, _ = _choose_tiles(rows, N, itemsize, budget)
    row_tiles = pl.cdiv(rows, tile_rows)
    spatial_tiles = pl.cdiv(N, tile_n)

    cost = pl.CostEstimate(
        flops=5 * rows * N,
        transcendentals=rows * N,
        bytes_accessed=rows * N * itemsize + rows * 4,
    )

    if spatial_tiles == 1:
        kernel = functools.partial(
            _lse_pool_kernel_single, r=float(r), eps=float(eps), inv_n=1.0 / float(N))
        grid_spec = pltpu.PrefetchScalarGridSpec(
            num_scalar_prefetch=0,
            grid=(row_tiles,),
            in_specs=[pl.BlockSpec((tile_rows, tile_n), lambda i: (i, 0))],
            out_specs=pl.BlockSpec((tile_rows, 1), lambda i: (i, 0)),
        )
        dims = ("parallel",)
    else:
        mask_tail = (N % tile_n) != 0
        kernel = functools.partial(
            _lse_pool_kernel_split, r=float(r), eps=float(eps),
            n_total=int(N), tile_n=int(tile_n), mask_tail=bool(mask_tail))
        grid_spec = pltpu.PrefetchScalarGridSpec(
            num_scalar_prefetch=0,
            grid=(row_tiles, spatial_tiles),
            in_specs=[pl.BlockSpec((tile_rows, tile_n), lambda i, k: (i, k))],
            out_specs=pl.BlockSpec((tile_rows, 1), lambda i, k: (i, 0)),
            scratch_shapes=[
                pltpu.VMEM((tile_rows, 1), jnp.float32),  # running max
                pltpu.VMEM((tile_rows, 1), jnp.float32),  # running rescaled sum
            ],
        )
        dims = ("parallel", "arbitrary")

    out = pl.pallas_call(
        kernel,
        out_shape=jax.ShapeDtypeStruct((rows, 1), jnp.float32),
        grid_spec=grid_spec,
        compiler_params=pltpu.CompilerParams(
            dimension_semantics=dims,
            vmem_limit_bytes=vmem_limit,
        ),
        cost_estimate=cost,
    )(xf)

    return out[:, 0].reshape(B, C)


def lse_pooling_ref(x, r=10.0, eps=1e-6):
    B, C = x.shape[0], x.shape[1]
    xf = x.reshape(B, C, -1).astype(jnp.float32)
    x_max = jnp.max(xf, axis=2, keepdims=True)
    x_exp = jnp.exp(r * (xf - x_max))
    x_lse = x_max + (1.0 / r) * jnp.log(eps + jnp.mean(x_exp, axis=2, keepdims=True))
    return x_lse[..., 0]


if __name__ == "__main__":
    key = jax.random.PRNGKey(0)
    k1, k2, k3, k4, k5 = jax.random.split(key, 5)
    r, eps = 10.0, 1e-6

    # Primary shape implied by the module (B=2, C=4, H=W=16): single-pass fast path.
    x1 = jax.random.normal(k1, (2, 4, 16, 16), dtype=jnp.float32)
    out1 = jax.block_until_ready(lse_pooling(x1, r=r, eps=eps))
    ref1 = lse_pooling_ref(x1, r=r, eps=eps)
    assert out1.shape == (2, 4), out1.shape
    assert jnp.allclose(out1, ref1, atol=1e-5, rtol=1e-5), (out1, ref1)

    # Ragged row count (rows = 21) -> balanced 2-tile row split + masked boundary block.
    x2 = jax.random.normal(k2, (3, 7, 16, 16), dtype=jnp.float32)
    out2 = jax.block_until_ready(lse_pooling(x2, r=r, eps=eps))
    ref2 = lse_pooling_ref(x2, r=r, eps=eps)
    assert out2.shape == (3, 7), out2.shape
    assert jnp.allclose(out2, ref2, atol=1e-5, rtol=1e-5), (out2, ref2)

    # Odd spatial size (H*W = 35, not a multiple of 128) handled as a full-extent block.
    x3 = jax.random.normal(k3, (2, 3, 7, 5), dtype=jnp.float32)
    out3 = jax.block_until_ready(lse_pooling(x3, r=r, eps=eps))
    ref3 = lse_pooling_ref(x3, r=r, eps=eps)
    assert out3.shape == (2, 3), out3.shape
    assert jnp.allclose(out3, ref3, atol=1e-5, rtol=1e-5), (out3, ref3)

    # Force the spatial-split (online-LSE) path + tail-column masking with a small
    # per-step budget override so it is exercised at a small test shape.
    x4 = jax.random.normal(k4, (2, 4, 32, 40), dtype=jnp.float32)
    out4 = jax.block_until_ready(lse_pooling(x4, r=r, eps=eps, step_budget=100_000))
    ref4 = lse_pooling_ref(x4, r=r, eps=eps)
    assert out4.shape == (2, 4), out4.shape
    assert jnp.allclose(out4, ref4, atol=1e-5, rtol=1e-5), (out4, ref4)

    # bf16 input: exercises dtype-aware (16, 128) sublane tiling + in-VMEM f32 upcast.
    x5 = jax.random.normal(k5, (5, 8, 16, 16), dtype=jnp.float32).astype(jnp.bfloat16)
    out5 = jax.block_until_ready(lse_pooling(x5, r=r, eps=eps))
    ref5 = lse_pooling_ref(x5, r=r, eps=eps)
    assert out5.shape == (5, 8), out5.shape
    assert jnp.allclose(out5, ref5, atol=1e-4, rtol=1e-4), (out5, ref5)

    print("KERNEL_OK")
</pallas_src>

<mosaic_0001>
module attributes {stable_mosaic.version = 11 : i64} {
  func.func @_lse_pool_kernel_single(%arg0: i32, %arg1: memref<8x256xf32, #tpu.memory_space<vmem>>, %arg2: memref<8x1xf32, #tpu.memory_space<vmem>>) attributes {dimension_semantics = [#tpu.dimension_semantics<parallel>], iteration_bounds = array<i64: 1>, scalar_prefetch = 0 : i64, scratch_operands = 0 : i64, tpu.core_type = #tpu.core_type<tc>, window_params = [{transform_indices = @transform_0, window_bounds = array<i64: 8, 256>}, {transform_indices = @transform_1, window_bounds = array<i64: 8, 1>}]} {
    %c0 = arith.constant 0 : index
    %c0_0 = arith.constant 0 : index
    %0 = vector.load %arg1[%c0, %c0_0] : memref<8x256xf32, #tpu.memory_space<vmem>>, vector<8x256xf32>
    %cst = arith.constant dense<0xFF800000> : vector<8xf32>
    %1 = vector.multi_reduction <maximumf>, %0, %cst [1] : vector<8x256xf32> to vector<8xf32>
    %2 = vector.shape_cast %1 : vector<8xf32> to vector<8x1xf32>
    %3 = vector.broadcast %2 : vector<8x1xf32> to vector<8x256xf32>
    %4 = arith.subf %0, %3 : vector<8x256xf32>
    %cst_1 = arith.constant 1.000000e+01 : f32
    %5 = vector.broadcast %cst_1 : f32 to vector<8x256xf32>
    %6 = arith.mulf %5, %4 : vector<8x256xf32>
    %7 = math.exp %6 : vector<8x256xf32>
    %cst_2 = arith.constant dense<0.000000e+00> : vector<8xf32>
    %8 = vector.multi_reduction <add>, %7, %cst_2 [1] : vector<8x256xf32> to vector<8xf32>
    %9 = vector.shape_cast %8 : vector<8xf32> to vector<8x1xf32>
    %cst_3 = arith.constant 3.906250e-03 : f32
    %10 = vector.broadcast %cst_3 : f32 to vector<8x1xf32>
    %11 = arith.mulf %9, %10 : vector<8x1xf32>
    %cst_4 = arith.constant 9.99999997E-7 : f32
    %12 = vector.broadcast %cst_4 : f32 to vector<8x1xf32>
    %13 = arith.addf %12, %11 : vector<8x1xf32>
    %14 = math.log %13 : vector<8x1xf32>
    %cst_5 = arith.constant 1.000000e-01 : f32
    %15 = vector.broadcast %cst_5 : f32 to vector<8x1xf32>
    %16 = arith.mulf %15, %14 : vector<8x1xf32>
    %17 = arith.addf %2, %16 : vector<8x1xf32>
    %c0_6 = arith.constant 0 : index
    %c0_7 = arith.constant 0 : index
    %18 = vector.load %arg2[%c0_6, %c0_7] : memref<8x1xf32, #tpu.memory_space<vmem>>, vector<8x1xf32>
    tpu.vector_store %arg2[%c0_6, %c0_7], %17 {strides = array<i32>} : memref<8x1xf32, #tpu.memory_space<vmem>>, vector<8x1xf32>,
    return
  }
  func.func @transform_0(%arg0: i32) -> (i32, i32) {
    %c0_i32 = arith.constant 0 : i32
    %c0_i32_0 = arith.constant 0 : i32
    return %arg0, %c0_i32 : i32, i32
  }
  func.func @transform_1(%arg0: i32) -> (i32, i32) {
    %c0_i32 = arith.constant 0 : i32
    %c0_i32_0 = arith.constant 0 : i32
    return %arg0, %c0_i32 : i32, i32
  }
}

</mosaic_0001>

<llo_original>
// kernel: tpu_custom_call.1
$region0: #{tpu_custom_call.1}
  #allocation0 [shape = 'u32[]', space=smem, size = 0x4, offset = 0x4, fixed_abs, tag = 'smem constant byte address 0x4 - core index']
  #allocation1 [shape = 'u32[144,128]{1,0:T(1,128)}', space=vmem, size = 0x12000, scoped, tag = 'internal scratch']
  %s0 = inlined_call_operand.hbm [shape: f32[8,256], index: 0, kind: input, shape index: {}]
  %s1 = inlined_call_operand.vmem [shape: f32[8,1], index: 1, kind: output, shape index: {}]
  %s2 = sld [smem:[#allocation0]]
  $region18: #{tpu_custom_call.1} parent=0
    _
  %s4 = ssub.s32 1, %s2
  %s5 = scalar_select 0, %s4, %s2
  $region1: #{tpu_custom_call.1} parent=0
    #allocation2 [shape = 'u8[8192]{0}', space=vmem, size = 0x2000, scoped, tag = 'input window, operand 0, single buffered']
    #allocation3 [shape = 's32[1]{0}', space=sflag, size = 0x4, scoped, tag = 'scoped memory for tpu_custom_call.1']
    %6 = vsyncpa [#allocation3], 0
    // Predicated region
    $region2: #{tpu_custom_call.1} parent=1 // pred_check
      _
    $region3: #{tpu_custom_call.1} parent=1 // pred_check_branch
      %8 = sbr.rel (0) target = $region5
    $region4: #{tpu_custom_call.1} parent=1 // pred_region
      %s10 = ssub.s32 256, 256
      %11 = vsyncadd [#allocation3], %s10
      %s13 = sshll.u32 [#allocation2], 4
      %s14 = int_to_ptr.vmem [resolvable:$true] %s13
      %16 = dma.hbm_to_vmem [thread:$0]  %s0, 256, %s14, [#allocation3]
    $region5: #{tpu_custom_call.1} parent=1 // pred_fallthru
      _
    // Predicated region
    $region6: #{tpu_custom_call.1} parent=1 // pred_check
      _
    $region7: #{tpu_custom_call.1} parent=1 // pred_check_branch
      %18 = sbr.rel (0) target = $region9
    $region8: #{tpu_custom_call.1} parent=1 // pred_region
      %19 = dma.done [#allocation3], 256
    $region9: #{tpu_custom_call.1} parent=1 // pred_fallthru
      _
    %v20 = vld [vmem:[#allocation2] sm:$0xff]
    %v21 = vld [vmem:[#allocation2 + $0x8] sm:$0xff]
    %v22 = vmax.f32 %v20, %v21
    %23 = vmax.xlane.f32.xlu0 %v22
    %v24 = vpop.xlane.xlu0 %23
    %v25 = vsub.f32 %v20, %v24
    %v26 = vsub.f32 %v21, %v24
    %v27 = vmul.f32 %v25, 10.0
    %v28 = vmul.f32 %v26, 10.0
    %v29 = vmul.f32 %v27, 1.442695
    %v30 = vpow.pop %v29
    %v31 = vmul.f32 %v28, 1.442695
    %v32 = vpow.pop %v31
    %v33 = vadd.f32 %v30, %v32
    %34 = vadd.xlane.f32.xlu0 %v33
    %v35 = vpop.xlane.xlu0 %34
    %v36 = vmul.f32 %v35, 0.00390625
    %v37 = vadd.f32 %v36, 1e-06
    %v38 = vlog2.pop %v37
    %v39 = vmul.f32 %v38, 0.6931472
    %v40 = vmul.f32 %v39, 0.1
    %v41 = vadd.f32 %v24, %v40
    %vm42 = vcmask 7168
    %43 = vst.msk [vmem:[%s1] sm:$0xff] %vm42, %v41
    // Predicated region
    $region10: #{tpu_custom_call.1} parent=1 // pred_check
      _
    $region11: #{tpu_custom_call.1} parent=1 // pred_check_branch
      %45 = sbr.rel (0) target = $region13
    $region12: #{tpu_custom_call.1} parent=1 // pred_region
      _
    $region13: #{tpu_custom_call.1} parent=1 // pred_fallthru
      _
    // Predicated region
    $region14: #{tpu_custom_call.1} parent=1 // pred_check
      _
    $region15: #{tpu_custom_call.1} parent=1 // pred_check_branch
      %47 = sbr.rel (0) target = $region17
    $region16: #{tpu_custom_call.1} parent=1 // pred_region
      _
    $region17: #{tpu_custom_call.1} parent=1 // pred_fallthru
      _
    %48 = vsyncpa [#allocation3], 1

</llo_original>
